<compile_context>
chip_gen: v5e
topology: v5e:2x2
jax: 0.10.0
libtpu: 0.0.40
codegen_flags: <defaults>
</compile_context>

<pallas_src>
import jax
import jax.numpy as jnp
from jax.experimental import pallas as pl
from jax.experimental.pallas import tpu as pltpu

INPUT_SIZE = 10
HIDDEN_SIZE = 20
OUTPUT_SIZE = 2

HIDDEN_PAD = 32           # hidden padded 20->32 (zero cols/rows); one MXU pass either way
W1_ROW = 0                # w1.T rows 0..9   (cols 0..19 nonzero)
B1_ROW = 16               # b1 row           (cols 0..19 nonzero)
W2_ROW = 32               # w2.T rows 32..51 (cols 0..1 nonzero), rows 52..63 zero
B2_ROW = 64               # b2 row           (cols 0..1 nonzero)
P_ROWS = 80               # multiple of 16 -> bf16 sublane packing friendly
P_COLS = 128

DEFAULT_TILE_B = 8192     # batch-tile target (amortizes ~0.35 us grid-step overhead)
VMEM_BUDGET = 24 << 20    # double-buffered working-set target (safe on v7x's 64 MiB VMEM)


def _round_up(n, m):
    return ((n + m - 1) // m) * m


def mlp_kernel(x_ref, p_ref, o_ref):
    x = x_ref[...]                                                  # [tile, 10]

    # Parameter slab is resident; all row starts are sublane-tile aligned.
    w1t = p_ref[W1_ROW:W1_ROW + INPUT_SIZE, 0:HIDDEN_PAD]           # [10, 32]
    b1 = p_ref[B1_ROW:B1_ROW + 1, 0:HIDDEN_PAD].astype(jnp.float32)  # [1, 32]
    w2t = p_ref[W2_ROW:W2_ROW + HIDDEN_PAD, :]                      # [32, 128] fully aligned
    b2 = p_ref[B2_ROW:B2_ROW + 1, :].astype(jnp.float32)            # [1, 128]

    # fc1 on the MXU with f32 accumulation; bias + ReLU in f32 on the VPU.
    h = jnp.dot(x, w1t, preferred_element_type=jnp.float32)         # [tile, 32]
    h = jnp.maximum(h + b1, 0.0)                                    # pad cols stay 0

    # fc2 on the MXU (padded hidden rows of w2t are zero -> exact).
    y = jnp.dot(h.astype(w2t.dtype), w2t, preferred_element_type=jnp.float32) + b2
    o_ref[...] = y[:, :OUTPUT_SIZE].astype(o_ref.dtype)             # true-width store


def prepare_params(w1, b1, w2, b2, dtype=jnp.bfloat16):
    """Pack PyTorch-layout params (w1:[hid,in], b1:[hid], w2:[out,hid], b2:[out])
    into one [80, 128] slab (call once at init; hoists transposes off the
    per-forward path and collapses 4 tiny DMAs into one resident descriptor)."""
    p = jnp.zeros((P_ROWS, P_COLS), jnp.float32)
    p = p.at[W1_ROW:W1_ROW + INPUT_SIZE, 0:HIDDEN_SIZE].set(w1.T)
    p = p.at[B1_ROW, 0:HIDDEN_SIZE].set(b1)
    p = p.at[W2_ROW:W2_ROW + HIDDEN_SIZE, 0:OUTPUT_SIZE].set(w2.T)
    p = p.at[B2_ROW, 0:OUTPUT_SIZE].set(b2)
    return p.astype(dtype)


def simple_fc_forward(x, params, *, tile_b=DEFAULT_TILE_B):
    """x: [B, INPUT_SIZE]; params: output of prepare_params (bf16 or f32 stream).
    Returns f32 [B, OUTPUT_SIZE]."""
    B = x.shape[0]
    sdtype = params.dtype
    x = x.astype(sdtype)
    itemsize = jnp.dtype(sdtype).itemsize
    gran = 8 * (4 // itemsize)                 # sublane granularity: 8 (f32) / 16 (bf16)

    # VMEM per tile row: x and out tiles both occupy 128 lanes in VMEM regardless
    # of logical width; each is double-buffered by the BlockSpec pipeline.
    per_row = 2 * 128 * (itemsize + 4)         # x (stream dtype) + out (f32)
    max_tile_vmem = max(gran, (VMEM_BUDGET // per_row) // gran * gran)

    b_pad = _round_up(B, gran)                 # at most gran-1 extra rows (negligible)
    half = _round_up(pl.cdiv(b_pad, 2), gran)  # >=2 grid steps at large B (v7x: 2 TCs)
    tile = min(tile_b, max_tile_vmem, max(gran, half))
    tile = max(gran, (tile // gran) * gran)
    tile = min(tile, b_pad)

    if b_pad != B:                             # tiny sublane-alignment pad only
        x = jnp.pad(x, ((0, b_pad - B), (0, 0)))

    grid = (pl.cdiv(b_pad, tile),)             # ragged last block handled by Pallas

    # Scoped-VMEM limit sized from the actual double-buffered tiles (+ headroom);
    # 32 MiB cap is safe on v5e/v6e (128 MiB) and v7x (64 MiB physical).
    working = per_row * tile + 2 * P_ROWS * P_COLS * itemsize
    vmem_limit = int(min(32 << 20, max(16 << 20, working + (8 << 20))))

    out = pl.pallas_call(
        mlp_kernel,
        out_shape=jax.ShapeDtypeStruct((b_pad, OUTPUT_SIZE), jnp.float32),
        grid=grid,
        in_specs=[
            # activation stream: tiled over batch, auto double-buffered
            pl.BlockSpec((tile, INPUT_SIZE), lambda i: (i, 0)),
            # packed params: same block every step -> DMA'd once, stays resident
            pl.BlockSpec((P_ROWS, P_COLS), lambda i: (0, 0)),
        ],
        # true-width output: last dim equals full array dim -> legal block shape
        out_specs=pl.BlockSpec((tile, OUTPUT_SIZE), lambda i: (i, 0)),
        compiler_params=pltpu.CompilerParams(
            dimension_semantics=("parallel",),
            vmem_limit_bytes=vmem_limit,
        ),
    )(x, params)
    return out[:B] if b_pad != B else out


def init_params(key):
    """Deterministic init mimicking nn.Linear's uniform(-1/sqrt(fan_in), 1/sqrt(fan_in))."""
    k1, k2, k3, k4 = jax.random.split(key, 4)
    bound1 = 1.0 / (INPUT_SIZE ** 0.5)
    bound2 = 1.0 / (HIDDEN_SIZE ** 0.5)
    w1 = jax.random.uniform(k1, (HIDDEN_SIZE, INPUT_SIZE), jnp.float32, -bound1, bound1)
    b1 = jax.random.uniform(k2, (HIDDEN_SIZE,), jnp.float32, -bound1, bound1)
    w2 = jax.random.uniform(k3, (OUTPUT_SIZE, HIDDEN_SIZE), jnp.float32, -bound2, bound2)
    b2 = jax.random.uniform(k4, (OUTPUT_SIZE,), jnp.float32, -bound2, bound2)
    return w1, b1, w2, b2


if __name__ == "__main__":
    key = jax.random.PRNGKey(0)
    k_x, k_p = jax.random.split(key)
    batch = 8
    x = jax.random.normal(k_x, (batch, INPUT_SIZE), jnp.float32)
    w1, b1, w2, b2 = init_params(k_p)

    # Reference forward in plain JAX (f32)
    ref = jnp.maximum(x @ w1.T + b1, 0.0) @ w2.T + b2

    # f32 streaming path: strict check
    params_f32 = prepare_params(w1, b1, w2, b2, jnp.float32)
    out_f32 = jax.block_until_ready(simple_fc_forward(x, params_f32))
    assert out_f32.shape == (batch, OUTPUT_SIZE)
    assert jnp.allclose(out_f32, ref, atol=1e-5), "f32 mismatch vs reference"

    # default bf16 streaming path (f32 MXU accumulation + f32 epilogue)
    params_bf16 = prepare_params(w1, b1, w2, b2)  # bf16 by default
    out_bf16 = jax.block_until_ready(simple_fc_forward(x, params_bf16))
    assert out_bf16.shape == (batch, OUTPUT_SIZE)
    assert jnp.allclose(out_bf16, ref, atol=5e-2, rtol=5e-2), "bf16 mismatch vs reference"

    # multi-tile + ragged-last-block path (no full jnp.pad pass over x)
    batch2 = 300
    x2 = jax.random.normal(k_x, (batch2, INPUT_SIZE), jnp.float32)
    ref2 = jnp.maximum(x2 @ w1.T + b1, 0.0) @ w2.T + b2
    out2 = jax.block_until_ready(simple_fc_forward(x2, params_f32, tile_b=128))
    assert out2.shape == (batch2, OUTPUT_SIZE)
    assert jnp.allclose(out2, ref2, atol=1e-5), "ragged multi-tile mismatch vs reference"

    print("KERNEL_OK")
</pallas_src>

<mosaic_0001>
module attributes {stable_mosaic.version = 11 : i64} {
  func.func @mlp_kernel(%arg0: i32, %arg1: memref<8x10xf32, #tpu.memory_space<vmem>>, %arg2: memref<80x128xf32, #tpu.memory_space<vmem>>, %arg3: memref<8x2xf32, #tpu.memory_space<vmem>>) attributes {dimension_semantics = [#tpu.dimension_semantics<parallel>], iteration_bounds = array<i64: 1>, scalar_prefetch = 0 : i64, scratch_operands = 0 : i64, tpu.core_type = #tpu.core_type<tc>, window_params = [{transform_indices = @transform_0, window_bounds = array<i64: 8, 10>}, {pipeline_mode = #tpu.pipeline_mode<synchronous>, transform_indices = @transform_1, window_bounds = array<i64: 80, 128>}, {transform_indices = @transform_2, window_bounds = array<i64: 8, 2>}]} {
    %c0 = arith.constant 0 : index
    %c0_0 = arith.constant 0 : index
    %0 = vector.load %arg1[%c0, %c0_0] : memref<8x10xf32, #tpu.memory_space<vmem>>, vector<8x10xf32>
    %c0_1 = arith.constant 0 : index
    %c0_2 = arith.constant 0 : index
    %1 = vector.load %arg2[%c0_1, %c0_2] : memref<80x128xf32, #tpu.memory_space<vmem>>, vector<10x32xf32>
    %c16 = arith.constant 16 : index
    %c0_3 = arith.constant 0 : index
    %2 = vector.load %arg2[%c16, %c0_3] : memref<80x128xf32, #tpu.memory_space<vmem>>, vector<1x32xf32>
    %c32 = arith.constant 32 : index
    %c0_4 = arith.constant 0 : index
    %3 = vector.load %arg2[%c32, %c0_4] : memref<80x128xf32, #tpu.memory_space<vmem>>, vector<32x128xf32>
    %c64 = arith.constant 64 : index
    %c0_5 = arith.constant 0 : index
    %4 = vector.load %arg2[%c64, %c0_5] : memref<80x128xf32, #tpu.memory_space<vmem>>, vector<1x128xf32>
    %cst = arith.constant dense<0.000000e+00> : vector<8x32xf32>
    %5 = tpu.matmul %0, %1, %cst {dimension_numbers = #tpu.dot_dimension_numbers<[1], [0], [0], [1], [0, 0, 1, 1], [], []>} : vector<8x10xf32>, vector<10x32xf32>, vector<8x32xf32> -> vector<8x32xf32>
    %6 = vector.broadcast %2 : vector<1x32xf32> to vector<8x32xf32>
    %7 = arith.addf %5, %6 : vector<8x32xf32>
    %cst_6 = arith.constant 0.000000e+00 : f32
    %8 = vector.broadcast %cst_6 : f32 to vector<8x32xf32>
    %9 = arith.maximumf %7, %8 : vector<8x32xf32>
    %cst_7 = arith.constant dense<0.000000e+00> : vector<8x128xf32>
    %10 = tpu.matmul %9, %3, %cst_7 {dimension_numbers = #tpu.dot_dimension_numbers<[1], [0], [0], [1], [0, 0, 1, 1], [], []>} : vector<8x32xf32>, vector<32x128xf32>, vector<8x128xf32> -> vector<8x128xf32>
    %11 = vector.broadcast %4 : vector<1x128xf32> to vector<8x128xf32>
    %12 = arith.addf %10, %11 : vector<8x128xf32>
    %13 = vector.extract_strided_slice %12 {offsets = [0, 0], sizes = [8, 2], strides = [1, 1]} : vector<8x128xf32> to vector<8x2xf32>
    %c0_8 = arith.constant 0 : index
    %c0_9 = arith.constant 0 : index
    %14 = vector.load %arg3[%c0_8, %c0_9] : memref<8x2xf32, #tpu.memory_space<vmem>>, vector<8x2xf32>
    tpu.vector_store %arg3[%c0_8, %c0_9], %13 {strides = array<i32>} : memref<8x2xf32, #tpu.memory_space<vmem>>, vector<8x2xf32>,
    return
  }
  func.func @transform_0(%arg0: i32) -> (i32, i32) {
    %c0_i32 = arith.constant 0 : i32
    %c0_i32_0 = arith.constant 0 : i32
    return %arg0, %c0_i32 : i32, i32
  }
  func.func @transform_1(%arg0: i32) -> (i32, i32) {
    %c0_i32 = arith.constant 0 : i32
    %c0_i32_0 = arith.constant 0 : i32
    %c0_i32_1 = arith.constant 0 : i32
    return %c0_i32, %c0_i32_0 : i32, i32
  }
  func.func @transform_2(%arg0: i32) -> (i32, i32) {
    %c0_i32 = arith.constant 0 : i32
    %c0_i32_0 = arith.constant 0 : i32
    return %arg0, %c0_i32 : i32, i32
  }
}

</mosaic_0001>

<llo_original>
// kernel: tpu_custom_call.1
$region0: #{tpu_custom_call.1}
  #allocation0 [shape = 'u32[]', space=smem, size = 0x4, offset = 0x4, fixed_abs, tag = 'smem constant byte address 0x4 - core index']
  #allocation1 [shape = 'u32[72,128]{1,0:T(1,128)}', space=vmem, size = 0x9000, scoped, tag = 'internal scratch']
  %s0 = inlined_call_operand.hbm [shape: f32[8,10], index: 0, kind: input, shape index: {}]
  %s1 = inlined_call_operand.hbm [shape: f32[80,128], index: 1, kind: input, shape index: {}]
  %s2 = inlined_call_operand.vmem [shape: f32[8,2], index: 2, kind: output, shape index: {}]
  %s3 = sld [smem:[#allocation0]]
  $region26: #{tpu_custom_call.1} parent=0
    _
  %s5 = ssub.s32 1, %s3
  %s6 = scalar_select 0, %s5, %s3
  $region1: #{tpu_custom_call.1} parent=0
    #allocation2 [shape = 'u8[4096]{0}', space=vmem, size = 0x1000, scoped, tag = 'input window, operand 0, single buffered']
    #allocation3 [shape = 's32[1]{0}', space=sflag, size = 0x4, scoped, tag = 'scoped memory for tpu_custom_call.1']
    #allocation4 [shape = 'u8[40960]{0}', space=vmem, size = 0xa000, scoped, tag = 'input window, operand 1, single buffered']
    #allocation5 [shape = 's32[1]{0}', space=sflag, size = 0x4, scoped, tag = 'scoped memory for tpu_custom_call.1']
    %7 = vsyncpa [#allocation3], 0
    %8 = vsyncpa [#allocation5], 0
    // Predicated region
    $region2: #{tpu_custom_call.1} parent=1 // pred_check
      _
    $region3: #{tpu_custom_call.1} parent=1 // pred_check_branch
      %10 = sbr.rel (0) target = $region5
    $region4: #{tpu_custom_call.1} parent=1 // pred_region
      %12 = vsyncadd [#allocation3], 0
      %s14 = sshll.u32 %s0, 4
      %s15 = int_to_ptr.hbm [resolvable:$true] %s14
      %s16 = sshll.u32 [#allocation2], 4
      %s17 = int_to_ptr.vmem [resolvable:$true] %s16
      %19 = dma.hbm_to_vmem [thread:$0]  %s15, 128, %s17, [#allocation3]
    $region5: #{tpu_custom_call.1} parent=1 // pred_fallthru
      _
    // Predicated region
    $region6: #{tpu_custom_call.1} parent=1 // pred_check
      _
    $region7: #{tpu_custom_call.1} parent=1 // pred_check_branch
      %21 = sbr.rel (0) target = $region9
    $region8: #{tpu_custom_call.1} parent=1 // pred_region
      %23 = vsyncadd [#allocation5], 0
      %s24 = sshll.u32 %s1, 4
      %s25 = int_to_ptr.hbm [resolvable:$true] %s24
      %s26 = sshll.u32 [#allocation4], 4
      %s27 = int_to_ptr.vmem [resolvable:$true] %s26
      %32 = dma.hbm_to_vmem [thread:$0]  %s25, 1280, %s27, [#allocation5], 128, 128, 8
    $region9: #{tpu_custom_call.1} parent=1 // pred_fallthru
      _
    // Predicated region
    $region10: #{tpu_custom_call.1} parent=1 // pred_check
      _
    $region11: #{tpu_custom_call.1} parent=1 // pred_check_branch
      %34 = sbr.rel (0) target = $region13
    $region12: #{tpu_custom_call.1} parent=1 // pred_region
      %36 = dma.done [#allocation3], 128
    $region13: #{tpu_custom_call.1} parent=1 // pred_fallthru
      _
    // Predicated region
    $region14: #{tpu_custom_call.1} parent=1 // pred_check
      _
    $region15: #{tpu_custom_call.1} parent=1 // pred_check_branch
      %38 = sbr.rel (0) target = $region17
    $region16: #{tpu_custom_call.1} parent=1 // pred_region
      %40 = dma.done [#allocation5], 1280
    $region17: #{tpu_custom_call.1} parent=1 // pred_fallthru
      _
    %v41 = vld [vmem:[#allocation2] sm:$0xff]
    %v42 = vld [vmem:[#allocation4] sm:$0xff]
    %v43 = vld [vmem:[#allocation4 + $0x8] sm:$0x3]
    %v44 = vld [vmem:[#allocation4 + $0x10] sm:$0x1]
    %v45 = vld [vmem:[#allocation4 + $0x20] sm:$0xff]
    %v46 = vld [vmem:[#allocation4 + $0x28] sm:$0xff]
    %v47 = vld [vmem:[#allocation4 + $0x30] sm:$0xff]
    %v48 = vld [vmem:[#allocation4 + $0x38] sm:$0xff]
    %v49 = vld [vmem:[#allocation4 + $0x40] sm:$0x1]
    %v50 = vperm.slane %v44, 0
    %vm51 = vcmask 80896
    %v53 = vsel %vm51, %v41, 0
    %vm55 = vcmask 1041408
    %v57 = vsel %vm55, %v43, 0
    %59 = vmatpush.msra.mxu0 0.0
    %60 = vmatpush.msra.mxu0 0.0
    %61 = vmatpush.msra.mxu0 0.0
    %62 = vmatpush.msra.mxu0 0.0
    %63 = vmatpush.msra.mxu0 0.0
    %64 = vmatpush.msra.mxu0 0.0
    %65 = vmatpush.msra.mxu0 0.0
    %66 = vmatpush.msra.mxu0 0.0
    %67 = vmatpush.msra.mxu0 0.0
    %68 = vmatpush.msra.mxu0 0.0
    %69 = vmatpush.msra.mxu0 0.0
    %70 = vmatpush.msra.mxu0 0.0
    %71 = vmatpush.msra.mxu0 0.0
    %72 = vmatpush.msra.mxu0 0.0
    %73 = vmatpush.msra.mxu0 %v57
    %74 = vmatpush.msra.mxu0 %v42
    %75 = vmatmul.f32.gmra.mxu0 %v53
    %v76 = vpop.f32.mrf.mxu0
    %v77 = vadd.f32 %v50, %v76
    %78 = vdwg.mxu0
    %v79 = vmax.f32 %v77, 0.0
    %v80 = vperm.slane %v49, 0
    %vm81 = vcmask 261120
    %v83 = vsel %vm81, %v79, 0
    %85 = vmatpush.msra.mxu0 0.0
    %86 = vmatpush.msra.mxu0 0.0
    %87 = vmatpush.msra.mxu0 0.0
    %88 = vmatpush.msra.mxu0 0.0
    %89 = vmatpush.msra.mxu0 0.0
    %90 = vmatpush.msra.mxu0 0.0
    %91 = vmatpush.msra.mxu0 0.0
    %92 = vmatpush.msra.mxu0 0.0
    %93 = vmatpush.msra.mxu0 0.0
    %94 = vmatpush.msra.mxu0 0.0
    %95 = vmatpush.msra.mxu0 0.0
    %96 = vmatpush.msra.mxu0 0.0
    %97 = vmatpush.msra.mxu0 %v48
    %98 = vmatpush.msra.mxu0 %v47
    %99 = vmatpush.msra.mxu0 %v46
    %100 = vmatpush.msra.mxu0 %v45
    %101 = vmatmul.f32.gmra.mxu0 %v83
    %v102 = vpop.f32.mrf.mxu0
    %v103 = vadd.f32 %v80, %v102
    %104 = vdwg.mxu0
    %vm105 = vcmask 15360
    %106 = vst.msk [vmem:[%s2] sm:$0xff] %vm105, %v103
    // Predicated region
    $region18: #{tpu_custom_call.1} parent=1 // pred_check
      _
    $region19: #{tpu_custom_call.1} parent=1 // pred_check_branch
      %108 = sbr.rel (0) target = $region21
    $region20: #{tpu_custom_call.1} parent=1 // pred_region
      _
    $region21: #{tpu_custom_call.1} parent=1 // pred_fallthru
      _
    // Predicated region
    $region22: #{tpu_custom_call.1} parent=1 // pred_check
      _
    $region23: #{tpu_custom_call.1} parent=1 // pred_check_branch
      %110 = sbr.rel (0) target = $region25
    $region24: #{tpu_custom_call.1} parent=1 // pred_region
      _
    $region25: #{tpu_custom_call.1} parent=1 // pred_fallthru
      _
    %111 = vsyncpa [#allocation3], 1
    %112 = vsyncpa [#allocation5], 1

</llo_original>
